<compile_context>
chip_gen: v7x
topology: tpu7x:2x2x1
jax: 0.10.0
libtpu: 0.0.40
codegen_flags: <defaults>
</compile_context>

<pallas_src>
import jax
import jax.numpy as jnp
from jax.experimental import pallas as pl
from jax.experimental.pallas import tpu as pltpu


def _ordinal_kernel(a_ref, b_ref, ord_ref, dec_ref):
    # a_ref / b_ref / ord_ref: (1, K, TP) blocks; dec_ref: (1, 1, TP).
    a = a_ref[...].astype(jnp.float32)
    b = b_ref[...].astype(jnp.float32)
    # softmax over the 2-element pair (A, B), second component:
    #   exp(B) / (exp(A) + exp(B)) == sigmoid(B - A) == 1 / (1 + exp(A - B))
    p = 1.0 / (1.0 + jnp.exp(a - b))
    ord_ref[...] = p
    dec_ref[...] = jnp.sum(p, axis=1, keepdims=True)


def _pick_lane_tile(padded_p, cap=2048):
    """Largest multiple of 128 that divides padded_p, capped at `cap`."""
    best = 128
    t = 128
    while t <= min(padded_p, cap):
        if padded_p % t == 0:
            best = t
        t += 128
    return best


def ordinal_regression_layer(x):
    """x: (N, C, H, W) float array (NCHW, matching the PyTorch module).

    Returns (decode_c, ord_c1):
      decode_c: (N, 1, H, W) float32
      ord_c1:   (N, C//2, H, W) float32
    """
    N, C, H, W = x.shape
    K = C // 2
    P = H * W

    # Pad the spatial (lane) axis to a multiple of 128 only if needed.
    Pp = ((P + 127) // 128) * 128
    if Pp == P:
        # Free metadata reshape: row k = [A_k (P lanes) | B_k (P lanes)].
        x2 = x.reshape(N, K, 2 * P)
    else:
        # TODO(synk): a masked-tail kernel would avoid this single pad copy.
        x4 = x.reshape(N, K, 2, P)
        x4 = jnp.pad(x4, ((0, 0), (0, 0), (0, 0), (0, Pp - P)))
        x2 = x4.reshape(N, K, 2 * Pp)

    TP = _pick_lane_tile(Pp)
    nblk = Pp // TP

    ord_flat, dec_flat = pl.pallas_call(
        _ordinal_kernel,
        out_shape=(
            jax.ShapeDtypeStruct((N, K, Pp), jnp.float32),
            jax.ShapeDtypeStruct((N, 1, Pp), jnp.float32),
        ),
        grid_spec=pltpu.PrefetchScalarGridSpec(
            num_scalar_prefetch=0,
            grid=(N, nblk),
            in_specs=[
                # A: even channels -> first Pp lanes of each row.
                pl.BlockSpec((1, K, TP), lambda n, p: (n, 0, p)),
                # B: odd channels -> last Pp lanes (offset by nblk lane-blocks).
                pl.BlockSpec((1, K, TP), lambda n, p: (n, 0, p + nblk)),
            ],
            out_specs=[
                pl.BlockSpec((1, K, TP), lambda n, p: (n, 0, p)),
                pl.BlockSpec((1, 1, TP), lambda n, p: (n, 0, p)),
            ],
        ),
        compiler_params=pltpu.CompilerParams(
            dimension_semantics=("parallel", "parallel"),
        ),
    )(x2, x2)

    if Pp != P:
        ord_flat = ord_flat[:, :, :P]
        dec_flat = dec_flat[:, :, :P]

    ord_c1 = ord_flat.reshape(N, K, H, W)
    decode_c = dec_flat.reshape(N, 1, H, W)
    return decode_c, ord_c1


def _reference(x):
    # Pure-JAX reference of the PyTorch forward for validation.
    N, C, H, W = x.shape
    K = C // 2
    A = x[:, 0::2, :, :].reshape(N, 1, K * H * W)
    B = x[:, 1::2, :, :].reshape(N, 1, K * H * W)
    cat = jnp.concatenate([A, B], axis=1)
    ord_c = jax.nn.softmax(cat, axis=1)
    ord_c1 = ord_c[:, 1, :].reshape(N, K, H, W)
    decode_c = jnp.sum(ord_c1, axis=1).reshape(N, 1, H, W)
    return decode_c, ord_c1


if __name__ == "__main__":
    key = jax.random.PRNGKey(0)
    N, C, H, W = 2, 4, 16, 16
    x = jax.random.normal(key, (N, C, H, W), dtype=jnp.float32)

    decode_c, ord_c1 = ordinal_regression_layer(x)
    jax.block_until_ready((decode_c, ord_c1))

    dec_ref, ord_ref = _reference(x)
    assert decode_c.shape == (N, 1, H, W)
    assert ord_c1.shape == (N, C // 2, H, W)
    assert jnp.allclose(decode_c, dec_ref, atol=1e-5, rtol=1e-5)
    assert jnp.allclose(ord_c1, ord_ref, atol=1e-5, rtol=1e-5)

    print("KERNEL_OK")
</pallas_src>

<mosaic_0001>
module attributes {stable_mosaic.version = 11 : i64} {
  func.func @_ordinal_kernel(%arg0: i32, %arg1: i32, %arg2: memref<1x2x256xf32, #tpu.memory_space<vmem>>, %arg3: memref<1x2x256xf32, #tpu.memory_space<vmem>>, %arg4: memref<1x2x256xf32, #tpu.memory_space<vmem>>, %arg5: memref<1x1x256xf32, #tpu.memory_space<vmem>>) attributes {dimension_semantics = [#tpu.dimension_semantics<parallel>, #tpu.dimension_semantics<parallel>], iteration_bounds = array<i64: 2, 1>, scalar_prefetch = 0 : i64, scratch_operands = 0 : i64, tpu.core_type = #tpu.core_type<tc>, window_params = [{transform_indices = @transform_0, window_bounds = array<i64: 1, 2, 256>}, {transform_indices = @transform_1, window_bounds = array<i64: 1, 2, 256>}, {transform_indices = @transform_2, window_bounds = array<i64: 1, 2, 256>}, {transform_indices = @transform_3, window_bounds = array<i64: 1, 1, 256>}]} {
    %c0 = arith.constant 0 : index
    %c0_0 = arith.constant 0 : index
    %c0_1 = arith.constant 0 : index
    %0 = vector.load %arg2[%c0, %c0_0, %c0_1] : memref<1x2x256xf32, #tpu.memory_space<vmem>>, vector<1x2x256xf32>
    %c0_2 = arith.constant 0 : index
    %c0_3 = arith.constant 0 : index
    %c0_4 = arith.constant 0 : index
    %1 = vector.load %arg3[%c0_2, %c0_3, %c0_4] : memref<1x2x256xf32, #tpu.memory_space<vmem>>, vector<1x2x256xf32>
    %2 = arith.subf %0, %1 : vector<1x2x256xf32>
    %3 = math.exp %2 : vector<1x2x256xf32>
    %cst = arith.constant 1.000000e+00 : f32
    %4 = vector.broadcast %cst : f32 to vector<1x2x256xf32>
    %5 = arith.addf %4, %3 : vector<1x2x256xf32>
    %cst_5 = arith.constant 1.000000e+00 : f32
    %6 = vector.broadcast %cst_5 : f32 to vector<1x2x256xf32>
    %7 = arith.divf %6, %5 : vector<1x2x256xf32>
    %c0_6 = arith.constant 0 : index
    %c0_7 = arith.constant 0 : index
    %c0_8 = arith.constant 0 : index
    %8 = vector.load %arg4[%c0_6, %c0_7, %c0_8] : memref<1x2x256xf32, #tpu.memory_space<vmem>>, vector<1x2x256xf32>
    tpu.vector_store %arg4[%c0_6, %c0_7, %c0_8], %7 {strides = array<i32>} : memref<1x2x256xf32, #tpu.memory_space<vmem>>, vector<1x2x256xf32>,
    %cst_9 = arith.constant dense<0.000000e+00> : vector<1x256xf32>
    %9 = vector.multi_reduction <add>, %7, %cst_9 [1] : vector<1x2x256xf32> to vector<1x256xf32>
    %10 = vector.shape_cast %9 : vector<1x256xf32> to vector<1x1x256xf32>
    %c0_10 = arith.constant 0 : index
    %c0_11 = arith.constant 0 : index
    %c0_12 = arith.constant 0 : index
    %11 = vector.load %arg5[%c0_10, %c0_11, %c0_12] : memref<1x1x256xf32, #tpu.memory_space<vmem>>, vector<1x1x256xf32>
    tpu.vector_store %arg5[%c0_10, %c0_11, %c0_12], %10 {strides = array<i32>} : memref<1x1x256xf32, #tpu.memory_space<vmem>>, vector<1x1x256xf32>,
    return
  }
  func.func @transform_0(%arg0: i32, %arg1: i32) -> (i32, i32, i32) {
    %c0_i32 = arith.constant 0 : i32
    %c0_i32_0 = arith.constant 0 : i32
    return %arg0, %c0_i32, %arg1 : i32, i32, i32
  }
  func.func @transform_1(%arg0: i32, %arg1: i32) -> (i32, i32, i32) {
    %c1_i32 = arith.constant 1 : i32
    %0 = arith.addi %arg1, %c1_i32 : i32
    %c0_i32 = arith.constant 0 : i32
    %c0_i32_0 = arith.constant 0 : i32
    return %arg0, %c0_i32, %0 : i32, i32, i32
  }
  func.func @transform_2(%arg0: i32, %arg1: i32) -> (i32, i32, i32) {
    %c0_i32 = arith.constant 0 : i32
    %c0_i32_0 = arith.constant 0 : i32
    return %arg0, %c0_i32, %arg1 : i32, i32, i32
  }
  func.func @transform_3(%arg0: i32, %arg1: i32) -> (i32, i32, i32) {
    %c0_i32 = arith.constant 0 : i32
    %c0_i32_0 = arith.constant 0 : i32
    return %arg0, %c0_i32, %arg1 : i32, i32, i32
  }
}

</mosaic_0001>

<llo_original>
// kernel: tpu_custom_call.1
$region0: #{tpu_custom_call.1}
  #allocation0 [shape = 'u32[]', space=smem, size = 0x4, offset = 0x4, fixed_abs, tag = 'smem constant byte address 0x4 - core index']
  #allocation1 [shape = 'u32[144,128]{1,0:T(1,128)}', space=vmem, size = 0x12000, scoped, tag = 'internal scratch']
  %s0 = inlined_call_operand.hbm [shape: f32[2,2,512], index: 0, kind: input, shape index: {}]
  %s1 = inlined_call_operand.hbm [shape: f32[2,2,512], index: 1, kind: input, shape index: {}]
  %s2 = inlined_call_operand.hbm [shape: f32[2,2,256], index: 2, kind: output, shape index: {0}]
  %s3 = inlined_call_operand.hbm [shape: f32[2,1,256], index: 3, kind: output, shape index: {1}]
  %4 = xla_tuple %s2, %s3
  %s5 = sld [smem:[#allocation0]]
  $region57: #{tpu_custom_call.1} parent=0
    _
  %s7 = ssub.s32 1, %s5
  %s8 = scalar_select 0, %s7, %s5
  $region1: #{tpu_custom_call.1} parent=0
    #allocation2 [shape = 'u8[4096]{0}', space=vmem, size = 0x1000, scoped, tag = 'input window, operand 0']
    #allocation3 [shape = 's32[2]{0}', space=sflag, size = 0x8, scoped, tag = 'scoped memory for tpu_custom_call.1']
    #allocation4 [shape = 's32[2]{0}', space=sflag, size = 0x8, scoped, tag = 'scoped memory for tpu_custom_call.1']
    #allocation5 [shape = 'u8[4096]{0}', space=vmem, size = 0x1000, scoped, tag = 'input window, operand 1']
    #allocation6 [shape = 's32[2]{0}', space=sflag, size = 0x8, scoped, tag = 'scoped memory for tpu_custom_call.1']
    #allocation7 [shape = 'u8[4096]{0}', space=vmem, size = 0x1000, scoped, tag = 'output window, operand 0']
    #allocation8 [shape = 'u8[2048]{0}', space=vmem, size = 0x800, scoped, tag = 'output window, operand 1']
    #allocation9 [shape = 's32[2]{0}', space=sflag, size = 0x8, scoped, tag = 'scoped memory for tpu_custom_call.1']
    %9 = vsyncpa [#allocation3], 0
    %s10 = scalar_lea.sflag [#allocation3], 1
    %11 = vsyncpa %s10, 0
    %12 = vsyncpa [#allocation6], 0
    %s13 = scalar_lea.sflag [#allocation6], 1
    %14 = vsyncpa %s13, 0
    %15 = vsyncpa [#allocation4], 0
    %s16 = scalar_lea.sflag [#allocation4], 1
    %17 = vsyncpa %s16, 0
    %18 = vsyncpa [#allocation9], 0
    %s19 = scalar_lea.sflag [#allocation9], 1
    %20 = vsyncpa %s19, 0
    loop: start=0, step=1, limit=4
    $region2: #{tpu_custom_call.1} parent=1 // loop_pre_header
      _
    $region3: #{tpu_custom_call.1} parent=1 // loop_header
      %s22 = sphi 0, %s26
      %p23 = scmp.ge.s32.totalorder %s22, 4
      %s29 = sphi 0, %s41
      %s30 = sphi 0, %s37
      %s31 = sphi 0, %s29
      %s32 = sphi 0, %s30
      %s33 = sphi 0, %s31
      %s34 = sphi 0, %s32
      %s46 = sphi 0, %s48
      %s49 = sphi 0, %s46
      %s50 = sphi 0, %s49
      %s66 = sphi 0, %s50
      %s76 = sphi 0, %s78
      %s79 = sphi 0, %s76
      %s80 = sphi 0, %s79
      %s96 = sphi 0, %s80
      %s104 = sphi 0, %s106
      %s107 = sphi 0, %s104
      %s108 = sphi 0, %s107
      %s124 = sphi 0, %s108
      %s132 = sphi 0, %s134
      %s135 = sphi 0, %s132
      %s136 = sphi 0, %s135
      %s152 = sphi 0, %s136
    $region4: #{tpu_custom_call.1} parent=1 // loop_header_branch
      %25 = sbr.rel (%p23) target = $region8
    $region5: #{tpu_custom_call.1} parent=1 // loop_body
      %s27 = ssub.s32 %s22, 1
      %s28 = ssub.s32 %s22, 2
      %s35 = sadd.s32 1, %s30
      %p36 = scmp.ge.s32.totalorder %s35, 1
      %s37 = scalar_select %p36, 0, %s35
      %s38 = sadd.s32 1, %s29
      %s39 = scalar_select %p36, %s38, %s29
      %p40 = scmp.ge.s32.totalorder %s39, 2
      %s41 = scalar_select %p40, 0, %s39
      %s42 = ssub.s32 %s29, %s41
      %s43 = ssub.s32 %s30, %s37
      %s44 = sor.u32 %s42, %s43
      %p45 = scmp.eq.s32.totalorder %s44, 0
      %s47 = sadd.s32 %s46, 1
      %s48 = scalar_select %p45, %s46, %s47
      %p51 = pneg %p45
      %p52 = scmp.eq.s32.totalorder %s22, 1
      %p53 = por %p51, %p52
      %p54 = scmp.ne.s32.totalorder %s46, %s49
      %p55 = scmp.eq.s32.totalorder %s22, 0
      %p56 = por %p54, %p55
      %p57 = scmp.ne.s32.totalorder %s46, %s49
      %p58 = scmp.eq.s32.totalorder %s27, 1
      %p59 = por %p57, %p58
      %p60 = scmp.ne.s32.totalorder %s49, %s50
      %p61 = scmp.eq.s32.totalorder %s27, 0
      %p62 = por %p60, %p61
      %p63 = scmp.ne.s32.totalorder %s49, %s50
      %p64 = scmp.eq.s32.totalorder %s28, 1
      %p65 = por %p63, %p64
      %p67 = scmp.ne.s32.totalorder %s50, %s66
      %p68 = scmp.eq.s32.totalorder %s28, 0
      %p69 = por %p67, %p68
      %s70 = sadd.s32 %s30, 1
      %s71 = sadd.s32 %s37, 1
      %s72 = ssub.s32 %s29, %s41
      %s73 = ssub.s32 %s70, %s71
      %s74 = sor.u32 %s72, %s73
      %p75 = scmp.eq.s32.totalorder %s74, 0
      %s77 = sadd.s32 %s76, 1
      %s78 = scalar_select %p75, %s76, %s77
      %p81 = pneg %p75
      %p82 = scmp.eq.s32.totalorder %s22, 1
      %p83 = por %p81, %p82
      %p84 = scmp.ne.s32.totalorder %s76, %s79
      %p85 = scmp.eq.s32.totalorder %s22, 0
      %p86 = por %p84, %p85
      %p87 = scmp.ne.s32.totalorder %s76, %s79
      %p88 = scmp.eq.s32.totalorder %s27, 1
      %p89 = por %p87, %p88
      %p90 = scmp.ne.s32.totalorder %s79, %s80
      %p91 = scmp.eq.s32.totalorder %s27, 0
      %p92 = por %p90, %p91
      %p93 = scmp.ne.s32.totalorder %s79, %s80
      %p94 = scmp.eq.s32.totalorder %s28, 1
      %p95 = por %p93, %p94
      %p97 = scmp.ne.s32.totalorder %s80, %s96
      %p98 = scmp.eq.s32.totalorder %s28, 0
      %p99 = por %p97, %p98
      %s100 = ssub.s32 %s29, %s41
      %s101 = ssub.s32 %s30, %s37
      %s102 = sor.u32 %s100, %s101
      %p103 = scmp.eq.s32.totalorder %s102, 0
      %s105 = sadd.s32 %s104, 1
      %s106 = scalar_select %p103, %s104, %s105
      %p109 = pneg %p103
      %p110 = scmp.eq.s32.totalorder %s22, 1
      %p111 = por %p109, %p110
      %p112 = scmp.ne.s32.totalorder %s104, %s107
      %p113 = scmp.eq.s32.totalorder %s22, 0
      %p114 = por %p112, %p113
      %p115 = scmp.ne.s32.totalorder %s104, %s107
      %p116 = scmp.eq.s32.totalorder %s27, 1
      %p117 = por %p115, %p116
      %p118 = scmp.ne.s32.totalorder %s107, %s108
      %p119 = scmp.eq.s32.totalorder %s27, 0
      %p120 = por %p118, %p119
      %p121 = scmp.ne.s32.totalorder %s107, %s108
      %p122 = scmp.eq.s32.totalorder %s28, 1
      %p123 = por %p121, %p122
      %p125 = scmp.ne.s32.totalorder %s108, %s124
      %p126 = scmp.eq.s32.totalorder %s28, 0
      %p127 = por %p125, %p126
      %s128 = ssub.s32 %s29, %s41
      %s129 = ssub.s32 %s30, %s37
      %s130 = sor.u32 %s128, %s129
      %p131 = scmp.eq.s32.totalorder %s130, 0
      %s133 = sadd.s32 %s132, 1
      %s134 = scalar_select %p131, %s132, %s133
      %p137 = pneg %p131
      %p138 = scmp.eq.s32.totalorder %s22, 1
      %p139 = por %p137, %p138
      %p140 = scmp.ne.s32.totalorder %s132, %s135
      %p141 = scmp.eq.s32.totalorder %s22, 0
      %p142 = por %p140, %p141
      %p143 = scmp.ne.s32.totalorder %s132, %s135
      %p144 = scmp.eq.s32.totalorder %s27, 1
      %p145 = por %p143, %p144
      %p146 = scmp.ne.s32.totalorder %s135, %s136
      %p147 = scmp.eq.s32.totalorder %s27, 0
      %p148 = por %p146, %p147
      %p149 = scmp.ne.s32.totalorder %s135, %s136
      %p150 = scmp.eq.s32.totalorder %s28, 1
      %p151 = por %p149, %p150
      %p153 = scmp.ne.s32.totalorder %s136, %s152
      %p154 = scmp.eq.s32.totalorder %s28, 0
      %p155 = por %p153, %p154
      %p156 = scmp.le.s32.totalorder 1, %s22
      %p157 = scmp.lt.s32.totalorder %s22, 3
      %p158 = pnand %p156, %p157
      %p159 = pneg %p158
      // Predicated region
      $region9: #{tpu_custom_call.1} parent=5 // pred_check
        _
      $region10: #{tpu_custom_call.1} parent=5 // pred_check_branch
        %161 = sbr.rel (%p158) target = $region12
      $region11: #{tpu_custom_call.1} parent=5 // pred_region
        %s162 = ssub.s32 %s22, 1
      $region12: #{tpu_custom_call.1} parent=5 // pred_fallthru
        _
      %p163 = scmp.lt.s32.totalorder %s22, 2
      // Predicated region
      $region13: #{tpu_custom_call.1} parent=5 // pred_check
        %p164 = pneg %p163
      $region14: #{tpu_custom_call.1} parent=5 // pred_check_branch
        %166 = sbr.rel (%p164) target = $region16
      $region15: #{tpu_custom_call.1} parent=5 // pred_region
        // Predicated region
        $region17: #{tpu_custom_call.1} parent=15 // pred_check
          %p167 = pneg %p56
        $region18: #{tpu_custom_call.1} parent=15 // pred_check_branch
          %169 = sbr.rel (%p167) target = $region20
        $region19: #{tpu_custom_call.1} parent=15 // pred_region
          %s170 = sand.u32 %s46, 1
          %s171 = scalar_lea.sflag [#allocation3], %s170
          %s172 = sand.u32 %s46, 1
          %s173 = smul.addr %s172, 4
          %s174 = scalar_lea.vmem [#allocation2], %s173
          %s175 = smul.u32 2, %s30
          %s177 = ssub.s32 64, 64
          %178 = vsyncadd %s171, %s177
          %s179 = smul.addr %s29, 4
          %s180 = sadd.s32 %s175, %s179
          %s181 = smul.addr %s180, 32
          %s182 = scalar_lea.hbm %s0, %s181
          %s184 = sshll.u32 %s174, 4
          %s185 = int_to_ptr.vmem [resolvable:$true] %s184
          %187 = dma.hbm_to_vmem [thread:$0]  %s182, 64, %s185, %s171
        $region20: #{tpu_custom_call.1} parent=15 // pred_fallthru
          _
        // Predicated region
        $region21: #{tpu_custom_call.1} parent=15 // pred_check
          %p188 = pneg %p86
        $region22: #{tpu_custom_call.1} parent=15 // pred_check_branch
          %190 = sbr.rel (%p188) target = $region24
        $region23: #{tpu_custom_call.1} parent=15 // pred_region
          %s191 = sand.u32 %s76, 1
          %s192 = scalar_lea.sflag [#allocation6], %s191
          %s193 = sand.u32 %s76, 1
          %s194 = smul.addr %s193, 4
          %s195 = scalar_lea.vmem [#allocation5], %s194
          %s196 = sadd.s32 %s30, 1
          %s197 = smul.u32 2, %s196
          %s199 = ssub.s32 64, 64
          %200 = vsyncadd %s192, %s199
          %s201 = smul.addr %s29, 4
          %s202 = sadd.s32 %s197, %s201
          %s203 = smul.addr %s202, 32
          %s204 = scalar_lea.hbm %s1, %s203
          %s206 = sshll.u32 %s195, 4
          %s207 = int_to_ptr.vmem [resolvable:$true] %s206
          %209 = dma.hbm_to_vmem [thread:$0]  %s204, 64, %s207, %s192
        $region24: #{tpu_custom_call.1} parent=15 // pred_fallthru
          _
      $region16: #{tpu_custom_call.1} parent=5 // pred_fallthru
        _
      %p210 = scmp.le.s32.totalorder 1, %s22
      %p211 = scmp.lt.s32.totalorder %s22, 3
      %p212 = pnand %p210, %p211
      %p213 = pneg %p212
      // Predicated region
      $region25: #{tpu_custom_call.1} parent=5 // pred_check
        _
      $region26: #{tpu_custom_call.1} parent=5 // pred_check_branch
        %215 = sbr.rel (%p212) target = $region28
      $region27: #{tpu_custom_call.1} parent=5 // pred_region
        %s216 = ssub.s32 %s22, 1
        %s217 = sand.u32 %s49, 1
        %s218 = scalar_lea.sflag [#allocation3], %s217
        %s219 = sand.u32 %s49, 1
        %s220 = smul.addr %s219, 4
        %s221 = scalar_lea.vmem [#allocation2], %s220
        // Predicated region
        $region29: #{tpu_custom_call.1} parent=27 // pred_check
          %p222 = pneg %p62
        $region30: #{tpu_custom_call.1} parent=27 // pred_check_branch
          %224 = sbr.rel (%p222) target = $region32
        $region31: #{tpu_custom_call.1} parent=27 // pred_region
          %225 = dma.done %s218, 64
        $region32: #{tpu_custom_call.1} parent=27 // pred_fallthru
          _
        %s226 = sand.u32 %s79, 1
        %s227 = scalar_lea.sflag [#allocation6], %s226
        %s228 = sand.u32 %s79, 1
        %s229 = smul.addr %s228, 4
        %s230 = scalar_lea.vmem [#allocation5], %s229
        // Predicated region
        $region33: #{tpu_custom_call.1} parent=27 // pred_check
          %p231 = pneg %p92
        $region34: #{tpu_custom_call.1} parent=27 // pred_check_branch
          %233 = sbr.rel (%p231) target = $region36
        $region35: #{tpu_custom_call.1} parent=27 // pred_region
          %234 = dma.done %s227, 64
        $region36: #{tpu_custom_call.1} parent=27 // pred_fallthru
          _
        %s235 = sand.u32 %s49, 1
        %s236 = scalar_lea.sflag [#allocation3], %s235
        %s237 = sand.u32 %s49, 1
        %s238 = smul.addr %s237, 4
        %s239 = scalar_lea.vmem [#allocation2], %s238
        %p240 = pneg %p62
        %p241 = pneg %p59
        %s242 = sand.u32 %s79, 1
        %s243 = scalar_lea.sflag [#allocation6], %s242
        %s244 = sand.u32 %s79, 1
        %s245 = smul.addr %s244, 4
        %s246 = scalar_lea.vmem [#allocation5], %s245
        %p247 = pneg %p92
        %p248 = pneg %p89
        %p249 = pneg %p120
        %p250 = pneg %p117
        %s251 = sand.u32 %s107, 1
        %s252 = scalar_lea.sflag [#allocation4], %s251
        %s253 = sand.u32 %s107, 1
        %s254 = smul.addr %s253, 4
        %s255 = scalar_lea.vmem [#allocation7], %s254
        %p256 = pneg %p148
        %p257 = pneg %p145
        %s258 = sand.u32 %s135, 1
        %s259 = scalar_lea.sflag [#allocation9], %s258
        %s260 = sand.u32 %s135, 1
        %s261 = smul.addr %s260, 2
        %s262 = scalar_lea.vmem [#allocation8], %s261
        %s263 = smul.u32 2, %s32
        %s264 = sadd.s32 %s32, 1
        %s265 = smul.u32 2, %s264
        %s266 = smul.u32 2, %s32
        %s267 = smul.u32 2, %s32
        %v268 = vld [vmem:[%s221] sm:$0xf]
        %v269 = vld [vmem:[%s230] sm:$0xf]
        %v270 = vsub.f32 %v268, %v269
        %v271 = vmul.f32 %v270, 1.442695
        %v272 = vpow.pop %v271
        %v273 = vadd.f32 %v272, 1.0
        %v274 = vrcp.pop %v273
        %v275 = vmul.f32 1.0, %v274
        %276 = vst [vmem:[%s255] sm:$0xf] %v275
        %v279 = vunpack.c.l.s4 1983009808
        %v280 = vunpack.c.0.s8 %v279
        %v281 = vlaneseq
        %v282 = vshrl.u32 %v281, 7
        %v283 = vsub.s32 %v280, %v282
        %v284 = vrot.slane %v275, %v283
        %v285 = vcombine.high %v284, %v284
        %vm288 = vcmask 1041408
        %v289 = vsel %vm288, %v284, 0.0
        %v290 = vrot.slane %v289, 4
        %v291 = vadd.f32 %v289, %v290
        %v292 = vrot.slane %v291, 2
        %v293 = vadd.f32 %v291, %v292
        %v294 = vrot.slane %v293, 1
        %v295 = vadd.f32 %v293, %v294
        %v296 = vsel %vm288, %v285, 0.0
        %v297 = vrot.slane %v296, 4
        %v298 = vadd.f32 %v296, %v297
        %v299 = vrot.slane %v298, 2
        %v300 = vadd.f32 %v298, %v299
        %v301 = vrot.slane %v300, 1
        %v302 = vadd.f32 %v300, %v301
        %v305 = vcombine.low %v295, %v302
        %v307 = vunpack.c.l.s4 1966171168
        %v308 = vunpack.c.0.s8 %v307
        %v309 = vlaneseq
        %v310 = vshrl.u32 %v309, 7
        %v311 = vsub.s32 %v308, %v310
        %v312 = vrot.slane %v305, %v311
        %v314 = vunpack.c.l.s4 1966171168
        %v315 = vunpack.c.0.s8 %v314
        %v316 = vlaneseq
        %v317 = vshrl.u32 %v316, 7
        %v318 = vsub.s32 %v315, %v317
        %v319 = vrot.slane %v312, %v318
        %v321 = vlaneseq
        %vm322 = vcmp.ge.s32.totalorder %v321, 0
        %vm323 = vcmp.lt.s32.totalorder %v321, 256
        %vm324 = vmand %vm322, %vm323
        %325 = vst.msk [vmem:[%s262] sm:$0x3] %vm324, %v319
        %s326 = sand.u32 %s107, 1
        %s327 = scalar_lea.sflag [#allocation4], %s326
        %s328 = sand.u32 %s107, 1
        %s329 = smul.addr %s328, 4
        %s330 = scalar_lea.vmem [#allocation7], %s329
        %s331 = sand.u32 %s135, 1
        %s332 = scalar_lea.sflag [#allocation9], %s331
        %s333 = sand.u32 %s135, 1
        %s334 = smul.addr %s333, 2
        %s335 = scalar_lea.vmem [#allocation8], %s334
        // Predicated region
        $region37: #{tpu_custom_call.1} parent=27 // pred_check
          %p336 = pneg %p117
        $region38: #{tpu_custom_call.1} parent=27 // pred_check_branch
          %338 = sbr.rel (%p336) target = $region40
        $region39: #{tpu_custom_call.1} parent=27 // pred_region
          %s339 = smul.u32 2, %s32
          %s341 = ssub.s32 64, 64
          %342 = vsyncadd %s327, %s341
          %s343 = smul.addr %s31, 2
          %s344 = sadd.s32 %s339, %s343
          %s345 = smul.addr %s344, 32
          %s346 = scalar_lea.hbm %s2, %s345
          %s348 = sshll.u32 %s330, 4
          %s349 = int_to_ptr.vmem [resolvable:$true] %s348
          %351 = dma.vmem_to_hbm [thread:$0]  %s349, 64, %s346, %s327
        $region40: #{tpu_custom_call.1} parent=27 // pred_fallthru
          _
        // Predicated region
        $region41: #{tpu_custom_call.1} parent=27 // pred_check
          %p352 = pneg %p145
        $region42: #{tpu_custom_call.1} parent=27 // pred_check_branch
          %354 = sbr.rel (%p352) target = $region44
        $region43: #{tpu_custom_call.1} parent=27 // pred_region
          %s355 = smul.u32 2, %s32
          %s357 = ssub.s32 32, 32
          %358 = vsyncadd %s332, %s357
          %s359 = smul.addr %s31, 2
          %s360 = sadd.s32 %s355, %s359
          %s361 = smul.addr %s360, 16
          %s362 = scalar_lea.hbm %s3, %s361
          %s364 = sshll.u32 %s335, 4
          %s365 = int_to_ptr.vmem [resolvable:$true] %s364
          %367 = dma.vmem_to_hbm [thread:$0]  %s365, 32, %s362, %s332
        $region44: #{tpu_custom_call.1} parent=27 // pred_fallthru
          _
      $region28: #{tpu_custom_call.1} parent=5 // pred_fallthru
        _
      %p368 = scmp.le.s32.totalorder 2, %s22
      // Predicated region
      $region45: #{tpu_custom_call.1} parent=5 // pred_check
        %p369 = pneg %p368
      $region46: #{tpu_custom_call.1} parent=5 // pred_check_branch
        %371 = sbr.rel (%p369) target = $region48
      $region47: #{tpu_custom_call.1} parent=5 // pred_region
        %s372 = ssub.s32 %s22, 2
        // Predicated region
        $region49: #{tpu_custom_call.1} parent=47 // pred_check
          %p373 = pneg %p123
        $region50: #{tpu_custom_call.1} parent=47 // pred_check_branch
          %375 = sbr.rel (%p373) target = $region52
        $region51: #{tpu_custom_call.1} parent=47 // pred_region
          %s376 = sand.u32 %s108, 1
          %s377 = scalar_lea.sflag [#allocation4], %s376
          %s378 = sand.u32 %s108, 1
          %s379 = smul.addr %s378, 4
          %s380 = scalar_lea.vmem [#allocation7], %s379
          %381 = dma.done %s377, 64
        $region52: #{tpu_custom_call.1} parent=47 // pred_fallthru
          _
        // Predicated region
        $region53: #{tpu_custom_call.1} parent=47 // pred_check
          %p382 = pneg %p151
        $region54: #{tpu_custom_call.1} parent=47 // pred_check_branch
          %384 = sbr.rel (%p382) target = $region56
        $region55: #{tpu_custom_call.1} parent=47 // pred_region
          %s385 = sand.u32 %s136, 1
          %s386 = scalar_lea.sflag [#allocation9], %s385
          %s387 = sand.u32 %s136, 1
          %s388 = smul.addr %s387, 2
          %s389 = scalar_lea.vmem [#allocation8], %s388
          %390 = dma.done %s386, 32
        $region56: #{tpu_custom_call.1} parent=47 // pred_fallthru
          _
      $region48: #{tpu_custom_call.1} parent=5 // pred_fallthru
        _
    $region6: #{tpu_custom_call.1} parent=1 // loop_footer
      %s26 = sadd.s32 1, %s22
    $region7: #{tpu_custom_call.1} parent=1 // loop_footer_branch
      %21 = sbr.rel target = $region3
    $region8: #{tpu_custom_call.1} parent=1 // loop_exit
      _
    %391 = vsyncpa [#allocation3], 1
    %s392 = scalar_lea.sflag [#allocation3], 1
    %393 = vsyncpa %s392, 1
    %394 = vsyncpa [#allocation6], 1
    %s395 = scalar_lea.sflag [#allocation6], 1
    %396 = vsyncpa %s395, 1
    %397 = vsyncpa [#allocation4], 1
    %s398 = scalar_lea.sflag [#allocation4], 1
    %399 = vsyncpa %s398, 1
    %400 = vsyncpa [#allocation9], 1
    %s401 = scalar_lea.sflag [#allocation9], 1
    %402 = vsyncpa %s401, 1

</llo_original>
